<compile_context>
chip_gen: v6e
topology: v6e:2x2x1
jax: 0.10.0
libtpu: 0.0.40
codegen_flags: <defaults>
</compile_context>

<pallas_src>
import math
import functools

import jax
import jax.numpy as jnp
from jax import lax
from jax.experimental import pallas as pl
from jax.experimental.pallas import tpu as pltpu

_INV_SQRT2 = 1.0 / math.sqrt(2.0)


# --------------------------------------------------------------------------
# Kernels
# --------------------------------------------------------------------------
def _block_small_kernel(x_ref, w_ref, b_ref, o_ref):
    """Single-tile fused path: out = x + gelu(x @ W + b)."""
    x = x_ref[...]
    y = jnp.dot(x, w_ref[...], preferred_element_type=jnp.float32)
    y = y + b_ref[...].astype(jnp.float32)
    g = 0.5 * y * (1.0 + lax.erf(y * _INV_SQRT2))      # exact GELU
    o_ref[...] = (x.astype(jnp.float32) + g).astype(o_ref.dtype)


def _block_kernel(x_ref, xres_ref, w_ref, b_ref, o_ref, acc_ref):
    """Tiled path: out = x + gelu(x @ W + b), grid (M, N, K), K innermost.

    x_ref    : (tm, tk)  x tile for the matmul        index (i, k)
    xres_ref : (tm, tn)  x tile for the residual add  index (i, j)
    w_ref    : (tk, tn)  weight tile, [in, out] layout index (k, j)
    b_ref    : (1,  tn)  bias tile                     index (0, j)
    o_ref    : (tm, tn)  output tile                   index (i, j)
    acc_ref  : (tm, tn)  f32 accumulator scratch (resident across K)
    """
    k = pl.program_id(2)

    @pl.when(k == 0)
    def _():
        acc_ref[...] = jnp.zeros_like(acc_ref)

    acc_ref[...] += jnp.dot(x_ref[...], w_ref[...],
                            preferred_element_type=jnp.float32)

    @pl.when(k == pl.num_programs(2) - 1)
    def _():
        y = acc_ref[...] + b_ref[...].astype(jnp.float32)
        g = 0.5 * y * (1.0 + lax.erf(y * _INV_SQRT2))   # exact GELU
        o_ref[...] = (xres_ref[...].astype(jnp.float32) + g).astype(o_ref.dtype)


# --------------------------------------------------------------------------
# Helpers
# --------------------------------------------------------------------------
def _round_up(x, m):
    return (x + m - 1) // m * m


def _pick_tile(dim, cap):
    """Largest multiple of 128 that divides `dim` and is <= cap (dim % 128 == 0)."""
    t = max(128, (min(cap, dim) // 128) * 128)
    while dim % t != 0:
        t -= 128
    return t


def _sublane(dtype):
    """Native sublane packing for the dtype (f32: 8, bf16: 16, int8/fp8: 32)."""
    return {4: 8, 2: 16, 1: 32}.get(jnp.dtype(dtype).itemsize, 8)


def prepare_block_params(w, b):
    """One-time parameter prep (keep OUT of the per-call jitted path).

    w: [out, in] (PyTorch nn.Linear layout), b: [out].
    Returns (w_t, b2): w_t is [in_p, out_p] ([in, out] layout, padded to a
    multiple of 128), b2 is [1, out_p].
    """
    size = w.shape[0]
    assert w.shape == (size, size) and b.shape == (size,)
    size_p = _round_up(size, 128)
    pad = size_p - size
    w_t = jnp.transpose(w)                      # [in, out] -> plain NN matmul on MXU
    if pad:
        w_t = jnp.pad(w_t, ((0, pad), (0, pad)))
        b = jnp.pad(b, ((0, pad),))
    return w_t, b.reshape(1, size_p)


# --------------------------------------------------------------------------
# Forward
# --------------------------------------------------------------------------
@functools.partial(jax.jit, static_argnames=("tm", "tn", "tk", "force_tiled"))
def block_forward(x, w_t, b2, *, tm=None, tn=None, tk=None, force_tiled=False):
    """x: [B, size]; w_t: [size_p, size_p] pre-padded [in, out] weight;
    b2: [1, size_p] pre-padded bias. Returns x + gelu(x @ W.T + b)."""
    B, size = x.shape
    size_p = w_t.shape[0]
    assert w_t.shape == (size_p, size_p) and b2.shape == (1, size_p)
    assert size_p % 128 == 0 and size <= size_p

    itemsize = jnp.dtype(x.dtype).itemsize
    sub = _sublane(x.dtype)
    pad_f = size_p - size

    # ---------------- single-block fast path (skip grid machinery) ----------
    B_small = _round_up(B, sub)
    if (not force_tiled) and B_small <= 512 and size_p <= 1024:
        pad_b = B_small - B
        x_p = jnp.pad(x, ((0, pad_b), (0, pad_f))) if (pad_b or pad_f) else x
        out_p = pl.pallas_call(
            _block_small_kernel,
            out_shape=jax.ShapeDtypeStruct((B_small, size_p), x.dtype),
            in_specs=[
                pl.BlockSpec((B_small, size_p), lambda: (0, 0)),
                pl.BlockSpec((size_p, size_p), lambda: (0, 0)),
                pl.BlockSpec((1, size_p), lambda: (0, 0)),
            ],
            out_specs=pl.BlockSpec((B_small, size_p), lambda: (0, 0)),
            compiler_params=pltpu.CompilerParams(
                vmem_limit_bytes=48 * 1024 * 1024),
        )(x_p, w_t, b2)
        return out_p[:B, :size] if (pad_b or pad_f) else out_p

    # ---------------- tiled path --------------------------------------------
    # Row tile: MXU-width aware (>=128 when the batch allows), dtype-sublane
    # aligned; pick the largest of {512,384,256,128} that divides the padded B.
    if tm is None:
        if B < 128:
            tm = _round_up(B, sub)
        else:
            B_p128 = _round_up(B, 128)
            tm = next(c for c in (512, 384, 256, 128) if B_p128 % c == 0)
    B_p = _round_up(B, tm)

    if tn is None:
        tn = _pick_tile(size_p, 1024)
    if tk is None:
        tk = _pick_tile(size_p, 1024)

    # v7x has 2 TensorCores: make sure the "parallel" axes expose >= 2 blocks.
    if B_p // tm == 1 and size_p // tn == 1 and size_p >= 256:
        tn = _pick_tile(size_p, size_p // 2)

    # Deeper weight buffering when the row tile is too small to hide the
    # (tk x tn) weight DMA behind compute (matters most on v5e).
    w_buffers = 3 if tm < 128 else 2

    # Keep the pipelined footprint comfortably inside v7x's 64 MiB VMEM.
    def _footprint(tm_, tn_, tk_):
        return ((tm_ * tk_ + 2 * tm_ * tn_) * itemsize * 2       # x, xres, out
                + tk_ * tn_ * itemsize * w_buffers                # weight
                + tn_ * 4 * 2 + tm_ * tn_ * 4)                    # bias + f32 acc

    budget = 40 * 1024 * 1024
    while _footprint(tm, tn, tk) > budget and tk > 128:
        tk = _pick_tile(size_p, tk - 128)
    while _footprint(tm, tn, tk) > budget and tn > 128:
        tn = _pick_tile(size_p, tn - 128)

    pad_b = B_p - B
    x_p = jnp.pad(x, ((0, pad_b), (0, pad_f))) if (pad_b or pad_f) else x

    grid = (B_p // tm, size_p // tn, size_p // tk)

    if w_buffers == 3:
        w_spec = pl.BlockSpec((tk, tn), lambda i, j, k: (k, j),
                              pipeline_mode=pl.Buffered(3))
    else:
        w_spec = pl.BlockSpec((tk, tn), lambda i, j, k: (k, j))

    out_p = pl.pallas_call(
        _block_kernel,
        out_shape=jax.ShapeDtypeStruct((B_p, size_p), x.dtype),
        grid_spec=pltpu.PrefetchScalarGridSpec(
            num_scalar_prefetch=0,
            grid=grid,
            in_specs=[
                pl.BlockSpec((tm, tk), lambda i, j, k: (i, k)),   # x (matmul)
                pl.BlockSpec((tm, tn), lambda i, j, k: (i, j)),   # x (residual)
                w_spec,                                           # W [in, out]
                pl.BlockSpec((1, tn), lambda i, j, k: (0, j)),    # bias
            ],
            out_specs=pl.BlockSpec((tm, tn), lambda i, j, k: (i, j)),
            scratch_shapes=[pltpu.VMEM((tm, tn), jnp.float32)],
        ),
        compiler_params=pltpu.CompilerParams(
            dimension_semantics=("parallel", "parallel", "arbitrary"),
            vmem_limit_bytes=48 * 1024 * 1024,
        ),
    )(x_p, x_p, w_t, b2)

    if pad_b or pad_f:
        out_p = out_p[:B, :size]
    return out_p


# --------------------------------------------------------------------------
# Reference + test
# --------------------------------------------------------------------------
def _reference(x, w, b):
    y = x @ w.T + b
    return x + 0.5 * y * (1.0 + lax.erf(y * _INV_SQRT2))


if __name__ == "__main__":
    key = jax.random.PRNGKey(0)

    # ---- primary test: module-typical small shape (hits the fast path) ----
    B, size = 8, 32
    kx, kw, kb, k2 = jax.random.split(key, 4)
    x = jax.random.normal(kx, (B, size), dtype=jnp.float32)
    bound = 1.0 / math.sqrt(size)
    w = jax.random.uniform(kw, (size, size), minval=-bound, maxval=bound,
                           dtype=jnp.float32)
    b = jax.random.uniform(kb, (size,), minval=-bound, maxval=bound,
                           dtype=jnp.float32)

    w_t, b2 = prepare_block_params(w, b)
    out = jax.block_until_ready(block_forward(x, w_t, b2))
    ref = _reference(x, w, b)
    assert out.shape == (B, size)
    assert jnp.allclose(out, ref, atol=1e-4, rtol=1e-4), "fast path mismatch"

    # ---- secondary test: force the tiled (grid + accumulator) path --------
    B2, size2 = 200, 256
    kx2, kw2, kb2 = jax.random.split(k2, 3)
    x2 = jax.random.normal(kx2, (B2, size2), dtype=jnp.float32)
    bound2 = 1.0 / math.sqrt(size2)
    w2 = jax.random.uniform(kw2, (size2, size2), minval=-bound2, maxval=bound2,
                            dtype=jnp.float32)
    bb2 = jax.random.uniform(kb2, (size2,), minval=-bound2, maxval=bound2,
                             dtype=jnp.float32)
    w2_t, b2_2 = prepare_block_params(w2, bb2)
    out2 = jax.block_until_ready(
        block_forward(x2, w2_t, b2_2, tm=128, tn=128, tk=128, force_tiled=True))
    ref2 = _reference(x2, w2, bb2)
    assert out2.shape == (B2, size2)
    assert jnp.allclose(out2, ref2, atol=1e-4, rtol=1e-4), "tiled path mismatch"

    print("KERNEL_OK")
</pallas_src>

<mosaic_0001>
module attributes {stable_mosaic.version = 11 : i64} {
  func.func @_block_small_kernel(%arg0: memref<8x128xf32, #tpu.memory_space<vmem>>, %arg1: memref<128x128xf32, #tpu.memory_space<vmem>>, %arg2: memref<1x128xf32, #tpu.memory_space<vmem>>, %arg3: memref<8x128xf32, #tpu.memory_space<vmem>>) attributes {dimension_semantics = [], scalar_prefetch = 0 : i64, scratch_operands = 0 : i64, tpu.core_type = #tpu.core_type<tc>} {
    %c0 = arith.constant 0 : index
    %c0_0 = arith.constant 0 : index
    %0 = vector.load %arg0[%c0, %c0_0] : memref<8x128xf32, #tpu.memory_space<vmem>>, vector<8x128xf32>
    %c0_1 = arith.constant 0 : index
    %c0_2 = arith.constant 0 : index
    %1 = vector.load %arg1[%c0_1, %c0_2] : memref<128x128xf32, #tpu.memory_space<vmem>>, vector<128x128xf32>
    %cst = arith.constant dense<0.000000e+00> : vector<8x128xf32>
    %2 = tpu.matmul %0, %1, %cst {dimension_numbers = #tpu.dot_dimension_numbers<[1], [0], [0], [1], [0, 0, 1, 1], [], []>} : vector<8x128xf32>, vector<128x128xf32>, vector<8x128xf32> -> vector<8x128xf32>
    %c0_3 = arith.constant 0 : index
    %c0_4 = arith.constant 0 : index
    %3 = vector.load %arg2[%c0_3, %c0_4] : memref<1x128xf32, #tpu.memory_space<vmem>>, vector<1x128xf32>
    %4 = vector.broadcast %3 : vector<1x128xf32> to vector<8x128xf32>
    %5 = arith.addf %2, %4 : vector<8x128xf32>
    %cst_5 = arith.constant 5.000000e-01 : f32
    %6 = vector.broadcast %cst_5 : f32 to vector<8x128xf32>
    %7 = arith.mulf %6, %5 : vector<8x128xf32>
    %cst_6 = arith.constant 0.707106769 : f32
    %8 = vector.broadcast %cst_6 : f32 to vector<8x128xf32>
    %9 = arith.mulf %5, %8 : vector<8x128xf32>
    %10 = math.erf %9 : vector<8x128xf32>
    %cst_7 = arith.constant 1.000000e+00 : f32
    %11 = vector.broadcast %cst_7 : f32 to vector<8x128xf32>
    %12 = arith.addf %11, %10 : vector<8x128xf32>
    %13 = arith.mulf %7, %12 : vector<8x128xf32>
    %14 = arith.addf %0, %13 : vector<8x128xf32>
    %c0_8 = arith.constant 0 : index
    %c0_9 = arith.constant 0 : index
    %15 = vector.load %arg3[%c0_8, %c0_9] : memref<8x128xf32, #tpu.memory_space<vmem>>, vector<8x128xf32>
    tpu.vector_store %arg3[%c0_8, %c0_9], %14 {strides = array<i32>} : memref<8x128xf32, #tpu.memory_space<vmem>>, vector<8x128xf32>,
    return
  }
}

</mosaic_0001>

<llo_original>
// kernel: block_forward.1
$region0: #{block_forward.1}
  #allocation0 [shape = 'u32[]', space=smem, size = 0x4, offset = 0x4, fixed_abs, tag = 'smem constant byte address 0x4 - core index']
  #allocation1 [shape = 'u32[144,128]{1,0:T(1,128)}', space=vmem, size = 0x12000, scoped, tag = 'internal scratch']
  %s0 = inlined_call_operand.vmem [shape: f32[8,128], index: 0, kind: input, shape index: {}]
  %s1 = inlined_call_operand.hbm [shape: f32[128,128], index: 1, kind: input, shape index: {}]
  %s2 = inlined_call_operand.vmem [shape: f32[1,128], index: 2, kind: input, shape index: {}]
  %s3 = inlined_call_operand.hbm [shape: f32[8,128], index: 3, kind: output, shape index: {}]
  %s4 = sld [smem:[#allocation0]]
  $region26: #{block_forward.1} parent=0
    _
  %s6 = ssub.s32 1, %s4
  %s7 = scalar_select 0, %s6, %s4
  $region1: #{block_forward.1} parent=0
    #allocation2 [shape = 'u8[65536]{0}', space=vmem, size = 0x10000, scoped, tag = 'input window, operand 1, single buffered']
    #allocation3 [shape = 's32[1]{0}', space=sflag, size = 0x4, scoped, tag = 'scoped memory for block_forward.1']
    #allocation4 [shape = 's32[1]{0}', space=sflag, size = 0x4, scoped, tag = 'scoped memory for block_forward.1']
    #allocation5 [shape = 'u8[4096]{0}', space=vmem, size = 0x1000, scoped, tag = 'output window, operand 0, single buffered']
    %8 = vsyncpa [#allocation3], 0
    %9 = vsyncpa [#allocation4], 0
    // Predicated region
    $region2: #{block_forward.1} parent=1 // pred_check
      _
    $region3: #{block_forward.1} parent=1 // pred_check_branch
      %11 = sbr.rel (0) target = $region5
    $region4: #{block_forward.1} parent=1 // pred_region
      _
    $region5: #{block_forward.1} parent=1 // pred_fallthru
      _
    // Predicated region
    $region6: #{block_forward.1} parent=1 // pred_check
      _
    $region7: #{block_forward.1} parent=1 // pred_check_branch
      %13 = sbr.rel (0) target = $region9
    $region8: #{block_forward.1} parent=1 // pred_region
      %s15 = ssub.s32 2048, 2048
      %16 = vsyncadd [#allocation3], %s15
      %s17 = sshll.u32 [#allocation2], 4
      %s18 = int_to_ptr.vmem [resolvable:$true] %s17
      %23 = dma.hbm_to_vmem [thread:$0]  %s1, 2048, %s18, [#allocation3], 128, 128, 8
    $region9: #{block_forward.1} parent=1 // pred_fallthru
      _
    // Predicated region
    $region10: #{block_forward.1} parent=1 // pred_check
      _
    $region11: #{block_forward.1} parent=1 // pred_check_branch
      %25 = sbr.rel (0) target = $region13
    $region12: #{block_forward.1} parent=1 // pred_region
      _
    $region13: #{block_forward.1} parent=1 // pred_fallthru
      _
    // Predicated region
    $region14: #{block_forward.1} parent=1 // pred_check
      _
    $region15: #{block_forward.1} parent=1 // pred_check_branch
      %27 = sbr.rel (0) target = $region17
    $region16: #{block_forward.1} parent=1 // pred_region
      %28 = dma.done [#allocation3], 2048
    $region17: #{block_forward.1} parent=1 // pred_fallthru
      _
    %v29 = vld [vmem:[%s0] sm:$0xff]
    %v30 = vld [vmem:[#allocation2] sm:$0xff]
    %v31 = vld [vmem:[#allocation2 + $0x8] sm:$0xff]
    %v32 = vld [vmem:[#allocation2 + $0x10] sm:$0xff]
    %v33 = vld [vmem:[#allocation2 + $0x18] sm:$0xff]
    %v34 = vld [vmem:[#allocation2 + $0x20] sm:$0xff]
    %v35 = vld [vmem:[#allocation2 + $0x28] sm:$0xff]
    %v36 = vld [vmem:[#allocation2 + $0x30] sm:$0xff]
    %v37 = vld [vmem:[#allocation2 + $0x38] sm:$0xff]
    %v38 = vld [vmem:[#allocation2 + $0x40] sm:$0xff]
    %v39 = vld [vmem:[#allocation2 + $0x48] sm:$0xff]
    %v40 = vld [vmem:[#allocation2 + $0x50] sm:$0xff]
    %v41 = vld [vmem:[#allocation2 + $0x58] sm:$0xff]
    %v42 = vld [vmem:[#allocation2 + $0x60] sm:$0xff]
    %v43 = vld [vmem:[#allocation2 + $0x68] sm:$0xff]
    %v44 = vld [vmem:[#allocation2 + $0x70] sm:$0xff]
    %v45 = vld [vmem:[#allocation2 + $0x78] sm:$0xff]
    %v46 = vld [vmem:[%s2] sm:$0x1]
    %v48 = vlaneseq
    %v49 = vshrl.u32 %v48, 7
    %v50 = vsub.s32 0, %v49
    %v51 = vrot.slane %v46, %v50
    %53 = vmatprep.subr.mxu0 0.0
    %54 = vmatpush1.msra.mxu0 %v45
    %55 = vmatprep.subr.mxu0 0.0
    %56 = vmatpush1.msra.mxu0 %v44
    %57 = vmatprep.subr.mxu0 0.0
    %58 = vmatpush1.msra.mxu0 %v43
    %59 = vmatprep.subr.mxu0 0.0
    %60 = vmatpush1.msra.mxu0 %v42
    %61 = vmatprep.subr.mxu0 0.0
    %62 = vmatpush1.msra.mxu0 %v41
    %63 = vmatprep.subr.mxu0 0.0
    %64 = vmatpush1.msra.mxu0 %v40
    %65 = vmatprep.subr.mxu0 0.0
    %66 = vmatpush1.msra.mxu0 %v39
    %67 = vmatprep.subr.mxu0 0.0
    %68 = vmatpush1.msra.mxu0 %v38
    %69 = vmatprep.subr.mxu0 0.0
    %70 = vmatpush1.msra.mxu0 %v37
    %71 = vmatprep.subr.mxu0 0.0
    %72 = vmatpush1.msra.mxu0 %v36
    %73 = vmatprep.subr.mxu0 0.0
    %74 = vmatpush1.msra.mxu0 %v35
    %75 = vmatprep.subr.mxu0 0.0
    %76 = vmatpush1.msra.mxu0 %v34
    %77 = vmatprep.subr.mxu0 0.0
    %78 = vmatpush1.msra.mxu0 %v33
    %79 = vmatprep.subr.mxu0 0.0
    %80 = vmatpush1.msra.mxu0 %v32
    %81 = vmatprep.subr.mxu0 0.0
    %82 = vmatpush1.msra.mxu0 %v31
    %83 = vmatprep.subr.mxu0 0.0
    %84 = vmatpush1.msra.mxu0 %v30
    %85 = vmatprep.subr.mxu0 0.0
    %86 = vmatpush2.msra.mxu0 0.0
    %87 = vmatprep.subr.mxu0 0.0
    %88 = vmatpush2.msra.mxu0 0.0
    %89 = vmatprep.subr.mxu0 0.0
    %90 = vmatpush2.msra.mxu0 0.0
    %91 = vmatprep.subr.mxu0 0.0
    %92 = vmatpush2.msra.mxu0 0.0
    %93 = vmatprep.subr.mxu0 0.0
    %94 = vmatpush2.msra.mxu0 0.0
    %95 = vmatprep.subr.mxu0 0.0
    %96 = vmatpush2.msra.mxu0 0.0
    %97 = vmatprep.subr.mxu0 0.0
    %98 = vmatpush2.msra.mxu0 0.0
    %99 = vmatprep.subr.mxu0 0.0
    %100 = vmatpush2.msra.mxu0 0.0
    %101 = vmatprep.subr.mxu0 0.0
    %102 = vmatpush2.msra.mxu0 0.0
    %103 = vmatprep.subr.mxu0 0.0
    %104 = vmatpush2.msra.mxu0 0.0
    %105 = vmatprep.subr.mxu0 0.0
    %106 = vmatpush2.msra.mxu0 0.0
    %107 = vmatprep.subr.mxu0 0.0
    %108 = vmatpush2.msra.mxu0 0.0
    %109 = vmatprep.subr.mxu0 0.0
    %110 = vmatpush2.msra.mxu0 0.0
    %111 = vmatprep.subr.mxu0 0.0
    %112 = vmatpush2.msra.mxu0 0.0
    %113 = vmatprep.subr.mxu0 0.0
    %114 = vmatpush2.msra.mxu0 0.0
    %115 = vmatprep.subr.mxu0 0.0
    %116 = vmatpush2.msra.mxu0 0.0
    %117 = vmatprep.mubr.f32.mxu0 0.0
    %118 = vmatmul.mubr.f32.gmra.mxu0 %v29
    %v119 = vpop.f32.mrf.mxu0
    %v120 = vadd.f32 %v51, %v119
    %v121 = vpop.f32.mrf.mxu0
    %122 = vdwg.mxu0
    %v123 = vmul.f32 %v120, 0.5
    %v124 = vmul.f32 %v120, 0.70710677
    %v125 = verf.f32.pop %v124
    %v126 = vadd.f32 %v125, 1.0
    %v127 = vmul.f32 %v123, %v126
    %v128 = vadd.f32 %v29, %v127
    %129 = vst [vmem:[#allocation5] sm:$0xff] %v128
    // Predicated region
    $region18: #{block_forward.1} parent=1 // pred_check
      _
    $region19: #{block_forward.1} parent=1 // pred_check_branch
      %131 = sbr.rel (0) target = $region21
    $region20: #{block_forward.1} parent=1 // pred_region
      %s133 = ssub.s32 128, 128
      %134 = vsyncadd [#allocation4], %s133
      %s136 = sshll.u32 [#allocation5], 4
      %s137 = int_to_ptr.vmem [resolvable:$true] %s136
      %139 = dma.vmem_to_hbm [thread:$0]  %s137, 128, %s3, [#allocation4]
    $region21: #{block_forward.1} parent=1 // pred_fallthru
      _
    // Predicated region
    $region22: #{block_forward.1} parent=1 // pred_check
      _
    $region23: #{block_forward.1} parent=1 // pred_check_branch
      %141 = sbr.rel (0) target = $region25
    $region24: #{block_forward.1} parent=1 // pred_region
      %142 = dma.done [#allocation4], 128
    $region25: #{block_forward.1} parent=1 // pred_fallthru
      _
    %143 = vsyncpa [#allocation3], 1
    %144 = vsyncpa [#allocation4], 1

</llo_original>
